<compile_context>
chip_gen: v5e
topology: v5e:2x2
jax: 0.10.0
libtpu: 0.0.40
codegen_flags: <defaults>
</compile_context>

<pallas_src>
import jax
import jax.numpy as jnp
from jax import lax
from jax.experimental import pallas as pl
from jax.experimental.pallas import tpu as pltpu


def _round_up(n, m):
    return ((n + m - 1) // m) * m


def critic_kernel(x_ref, a_ref, w1x_ref, w1a_ref, b1_ref, w3_ref, b3_ref,
                  out_ref):
    # x_ref:   (TB, dx)  f32      a_ref:   (TB, da)  f32
    # w1x_ref: (dx, H)   f32      w1a_ref: (da, H)   f32
    # b1_ref:  (1, H)    f32      w3_ref:  (1, H)    f32
    # b3_ref:  (1, 1)    f32 in SMEM
    # out_ref: (1, 1, TB) f32  (lane-dense along the batch)

    # fc1 (fused concat): h = x@w1x + a@w1a + b1, then ReLU.  f32 MXU dots.
    h = jnp.dot(x_ref[...], w1x_ref[...], preferred_element_type=jnp.float32)
    h = h + jnp.dot(a_ref[...], w1a_ref[...],
                    preferred_element_type=jnp.float32)
    h = jnp.maximum(h + b1_ref[...], 0.0)                      # (TB, H)

    # fc3 as (1, H) x (TB, H)^T -> (1, TB): lane-dense result, unmasked store.
    o = lax.dot_general(w3_ref[...], h,
                        dimension_numbers=(((1,), (1,)), ((), ())),
                        preferred_element_type=jnp.float32)    # (1, TB)
    o = jnp.maximum(o + b3_ref[0, 0], 0.0)
    out_ref[0] = o.astype(out_ref.dtype)


def critic_forward(x, a, params, *, tb_cap=4096):
    """x: (B, dx) or (dx,), a: (B, da) or (da,). Returns (B, 1) float32."""
    if x.ndim == 1:
        x = x[None, :]
    if a.ndim == 1:
        a = a[None, :]
    # No-op when the caller already hands in f32 (no extra HBM pass).
    x = x.astype(jnp.float32)
    a = a.astype(jnp.float32)
    B, dx = x.shape
    da = a.shape[1]

    w1, b1, w3, b3 = params["w1"], params["b1"], params["w3"], params["b3"]
    hidden = w1.shape[1]

    # Split W1 so concat([x, a]) never hits HBM.  Tiny weight-side reshapes only.
    w1x = w1[:dx].astype(jnp.float32)
    w1a = w1[dx:].astype(jnp.float32)
    b1f = b1.reshape(1, hidden).astype(jnp.float32)
    w3_row = w3.reshape(1, hidden).astype(jnp.float32)   # fc3 weights as a row
    b3f = b3.reshape(1, 1).astype(jnp.float32)

    # Batch tiling: big tiles to amortize per-grid-step overhead.  For large
    # batches keep >= 2 tiles so the "parallel" axis can use both TensorCores
    # on v7x.  Ragged last block is handled by the pipeline (garbage tail rows
    # are row-independent and sliced off below) — no jnp.pad copy.
    if B <= 1024:
        tb = _round_up(B, 16)
    else:
        tb = min(tb_cap, _round_up(pl.cdiv(B, 2), 16))
    n_tiles = pl.cdiv(B, tb)

    out = pl.pallas_call(
        critic_kernel,
        out_shape=jax.ShapeDtypeStruct((n_tiles, 1, tb), jnp.float32),
        grid_spec=pltpu.PrefetchScalarGridSpec(
            num_scalar_prefetch=0,
            grid=(n_tiles,),
            in_specs=[
                pl.BlockSpec((tb, dx), lambda i: (i, 0)),          # x tile
                pl.BlockSpec((tb, da), lambda i: (i, 0)),          # a tile
                pl.BlockSpec((dx, hidden), lambda i: (0, 0)),      # resident weights
                pl.BlockSpec((da, hidden), lambda i: (0, 0)),
                pl.BlockSpec((1, hidden), lambda i: (0, 0)),
                pl.BlockSpec((1, hidden), lambda i: (0, 0)),
                pl.BlockSpec(memory_space=pltpu.MemorySpace.SMEM),  # b3 scalar
            ],
            out_specs=pl.BlockSpec((1, 1, tb), lambda i: (i, 0, 0)),
        ),
        compiler_params=pltpu.CompilerParams(
            dimension_semantics=("parallel",),   # batch tiles are independent
            # Narrow blocks pad to 128 lanes in VMEM; budget explicitly so
            # tb=4096 double-buffered (~10-12 MiB) fits on v5e/v6e/v7x.
            vmem_limit_bytes=32 * 1024 * 1024,
        ),
    )(x, a, w1x, w1a, b1f, w3_row, b3f)
    # (n_tiles, 1, tb) -> (n_tiles*tb, 1), drop the ragged tail rows.
    return out.reshape(n_tiles * tb, 1)[:B]


def init_params(key, input_dim, hidden_dim):
    """Deterministic init mimicking nn.Linear's U(-1/sqrt(fan_in), 1/sqrt(fan_in)).
    Weights stored as [in, out] (transposed vs. PyTorch's [out, in])."""
    k1, k2, k3, k4, k5, k6 = jax.random.split(key, 6)
    bound1 = 1.0 / jnp.sqrt(input_dim)
    bound3 = 1.0 / jnp.sqrt(hidden_dim)
    return {
        "w1": jax.random.uniform(k1, (input_dim, hidden_dim), jnp.float32,
                                 -bound1, bound1),
        "b1": jax.random.uniform(k2, (1, hidden_dim), jnp.float32,
                                 -bound1, bound1),
        # fc2 exists in __init__ but is unused in forward; kept for parity.
        "w2": jax.random.uniform(k3, (hidden_dim, hidden_dim), jnp.float32,
                                 -bound3, bound3),
        "b2": jax.random.uniform(k4, (1, hidden_dim), jnp.float32,
                                 -bound3, bound3),
        "w3": jax.random.uniform(k5, (hidden_dim, 1), jnp.float32,
                                 -bound3, bound3),
        "b3": jax.random.uniform(k6, (1, 1), jnp.float32,
                                 -bound3, bound3),
    }


def reference_forward(x, a, params):
    """Pure-JAX f32 reference matching the PyTorch forward."""
    if x.ndim == 1:
        x = x[None, :]
    if a.ndim == 1:
        a = a[None, :]
    w1, b1, w3, b3 = params["w1"], params["b1"], params["w3"], params["b3"]
    cat = jnp.concatenate([x, a], axis=-1)
    h = jnp.maximum(cat @ w1 + b1.reshape(1, -1), 0.0)
    o = jnp.maximum(h @ w3 + b3.reshape(1, 1), 0.0)
    return o


if __name__ == "__main__":
    # Small shapes: batch=2, state dim=24, action dim=8 -> input_dim=32, hidden=32
    B, DX, DA, HID = 2, 24, 8, 32
    INPUT_DIM = DX + DA

    key = jax.random.PRNGKey(0)
    kx, ka, kp = jax.random.split(key, 3)
    x = jax.random.normal(kx, (B, DX), jnp.float32)
    a = jax.random.normal(ka, (B, DA), jnp.float32)
    params = init_params(kp, INPUT_DIM, HID)

    out = jax.block_until_ready(critic_forward(x, a, params))
    assert out.shape == (B, 1), out.shape
    ref = reference_forward(x, a, params)
    assert jnp.allclose(out, ref, atol=2e-3, rtol=2e-3), (out, ref)

    # Larger batch exercises the multi-tile + ragged-last-block path
    # (3000 rows -> 2 tiles of 1504, 8 garbage tail rows sliced away).
    B2 = 3000
    kx2, ka2 = jax.random.split(jax.random.PRNGKey(1), 2)
    x2 = jax.random.normal(kx2, (B2, DX), jnp.float32)
    a2 = jax.random.normal(ka2, (B2, DA), jnp.float32)
    out2 = jax.block_until_ready(critic_forward(x2, a2, params))
    ref2 = reference_forward(x2, a2, params)
    assert out2.shape == (B2, 1), out2.shape
    assert jnp.allclose(out2, ref2, atol=2e-3, rtol=2e-3)

    # 1-D input path (unsqueeze), mirroring the PyTorch forward.
    out1d = jax.block_until_ready(critic_forward(x[0], a[0], params))
    assert out1d.shape == (1, 1)
    assert jnp.allclose(out1d, ref[:1], atol=2e-3, rtol=2e-3)

    print("KERNEL_OK")
</pallas_src>

<mosaic_0001>
module attributes {stable_mosaic.version = 11 : i64} {
  func.func @critic_kernel(%arg0: i32, %arg1: memref<16x24xf32, #tpu.memory_space<vmem>>, %arg2: memref<16x8xf32, #tpu.memory_space<vmem>>, %arg3: memref<24x32xf32, #tpu.memory_space<vmem>>, %arg4: memref<8x32xf32, #tpu.memory_space<vmem>>, %arg5: memref<1x32xf32, #tpu.memory_space<vmem>>, %arg6: memref<1x32xf32, #tpu.memory_space<vmem>>, %arg7: memref<1x1xf32, #tpu.memory_space<smem>>, %arg8: memref<1x1x16xf32, #tpu.memory_space<vmem>>) attributes {dimension_semantics = [#tpu.dimension_semantics<parallel>], iteration_bounds = array<i64: 1>, scalar_prefetch = 0 : i64, scratch_operands = 0 : i64, tpu.core_type = #tpu.core_type<tc>, window_params = [{transform_indices = @transform_0, window_bounds = array<i64: 16, 24>}, {transform_indices = @transform_1, window_bounds = array<i64: 16, 8>}, {pipeline_mode = #tpu.pipeline_mode<synchronous>, transform_indices = @transform_2, window_bounds = array<i64: 24, 32>}, {pipeline_mode = #tpu.pipeline_mode<synchronous>, transform_indices = @transform_3, window_bounds = array<i64: 8, 32>}, {pipeline_mode = #tpu.pipeline_mode<synchronous>, transform_indices = @transform_4, window_bounds = array<i64: 1, 32>}, {pipeline_mode = #tpu.pipeline_mode<synchronous>, transform_indices = @transform_5, window_bounds = array<i64: 1, 32>}, {transform_indices = @transform_6, window_bounds = array<i64: 1, 1>}, {transform_indices = @transform_7, window_bounds = array<i64: 1, 1, 16>}]} {
    %c0 = arith.constant 0 : index
    %c0_0 = arith.constant 0 : index
    %0 = vector.load %arg1[%c0, %c0_0] : memref<16x24xf32, #tpu.memory_space<vmem>>, vector<16x24xf32>
    %c0_1 = arith.constant 0 : index
    %c0_2 = arith.constant 0 : index
    %1 = vector.load %arg3[%c0_1, %c0_2] : memref<24x32xf32, #tpu.memory_space<vmem>>, vector<24x32xf32>
    %cst = arith.constant dense<0.000000e+00> : vector<16x32xf32>
    %2 = tpu.matmul %0, %1, %cst {dimension_numbers = #tpu.dot_dimension_numbers<[1], [0], [0], [1], [0, 0, 1, 1], [], []>} : vector<16x24xf32>, vector<24x32xf32>, vector<16x32xf32> -> vector<16x32xf32>
    %c0_3 = arith.constant 0 : index
    %c0_4 = arith.constant 0 : index
    %3 = vector.load %arg2[%c0_3, %c0_4] : memref<16x8xf32, #tpu.memory_space<vmem>>, vector<16x8xf32>
    %c0_5 = arith.constant 0 : index
    %c0_6 = arith.constant 0 : index
    %4 = vector.load %arg4[%c0_5, %c0_6] : memref<8x32xf32, #tpu.memory_space<vmem>>, vector<8x32xf32>
    %cst_7 = arith.constant dense<0.000000e+00> : vector<16x32xf32>
    %5 = tpu.matmul %3, %4, %cst_7 {dimension_numbers = #tpu.dot_dimension_numbers<[1], [0], [0], [1], [0, 0, 1, 1], [], []>} : vector<16x8xf32>, vector<8x32xf32>, vector<16x32xf32> -> vector<16x32xf32>
    %6 = arith.addf %2, %5 : vector<16x32xf32>
    %c0_8 = arith.constant 0 : index
    %c0_9 = arith.constant 0 : index
    %7 = vector.load %arg5[%c0_8, %c0_9] : memref<1x32xf32, #tpu.memory_space<vmem>>, vector<1x32xf32>
    %8 = vector.broadcast %7 : vector<1x32xf32> to vector<16x32xf32>
    %9 = arith.addf %6, %8 : vector<16x32xf32>
    %cst_10 = arith.constant 0.000000e+00 : f32
    %10 = vector.broadcast %cst_10 : f32 to vector<16x32xf32>
    %11 = arith.maximumf %9, %10 : vector<16x32xf32>
    %c0_11 = arith.constant 0 : index
    %c0_12 = arith.constant 0 : index
    %12 = vector.load %arg6[%c0_11, %c0_12] : memref<1x32xf32, #tpu.memory_space<vmem>>, vector<1x32xf32>
    %cst_13 = arith.constant dense<0.000000e+00> : vector<1x16xf32>
    %13 = tpu.matmul %12, %11, %cst_13 {dimension_numbers = #tpu.dot_dimension_numbers<[1], [1], [0], [0], [0, 0, 1, 0], [], []>} : vector<1x32xf32>, vector<16x32xf32>, vector<1x16xf32> -> vector<1x16xf32>
    %c0_14 = arith.constant 0 : index
    %c0_15 = arith.constant 0 : index
    %14 = memref.load %arg7[%c0_14, %c0_15] : memref<1x1xf32, #tpu.memory_space<smem>>
    %15 = vector.broadcast %14 : f32 to vector<1x16xf32>
    %16 = arith.addf %13, %15 : vector<1x16xf32>
    %cst_16 = arith.constant 0.000000e+00 : f32
    %17 = vector.broadcast %cst_16 : f32 to vector<1x16xf32>
    %18 = arith.maximumf %16, %17 : vector<1x16xf32>
    %c0_17 = arith.constant 0 : index
    %c0_18 = arith.constant 0 : index
    %c0_19 = arith.constant 0 : index
    %19 = vector.load %arg8[%c0_17, %c0_18, %c0_19] : memref<1x1x16xf32, #tpu.memory_space<vmem>>, vector<1x1x16xf32>
    %20 = vector.shape_cast %19 : vector<1x1x16xf32> to vector<1x16xf32>
    %21 = vector.shape_cast %18 : vector<1x16xf32> to vector<1x1x16xf32>
    tpu.vector_store %arg8[%c0_17, %c0_18, %c0_19], %21 {strides = array<i32>} : memref<1x1x16xf32, #tpu.memory_space<vmem>>, vector<1x1x16xf32>,
    return
  }
  func.func @transform_0(%arg0: i32) -> (i32, i32) {
    %c0_i32 = arith.constant 0 : i32
    %c0_i32_0 = arith.constant 0 : i32
    return %arg0, %c0_i32 : i32, i32
  }
  func.func @transform_1(%arg0: i32) -> (i32, i32) {
    %c0_i32 = arith.constant 0 : i32
    %c0_i32_0 = arith.constant 0 : i32
    return %arg0, %c0_i32 : i32, i32
  }
  func.func @transform_2(%arg0: i32) -> (i32, i32) {
    %c0_i32 = arith.constant 0 : i32
    %c0_i32_0 = arith.constant 0 : i32
    %c0_i32_1 = arith.constant 0 : i32
    return %c0_i32, %c0_i32_0 : i32, i32
  }
  func.func @transform_3(%arg0: i32) -> (i32, i32) {
    %c0_i32 = arith.constant 0 : i32
    %c0_i32_0 = arith.constant 0 : i32
    %c0_i32_1 = arith.constant 0 : i32
    return %c0_i32, %c0_i32_0 : i32, i32
  }
  func.func @transform_4(%arg0: i32) -> (i32, i32) {
    %c0_i32 = arith.constant 0 : i32
    %c0_i32_0 = arith.constant 0 : i32
    %c0_i32_1 = arith.constant 0 : i32
    return %c0_i32, %c0_i32_0 : i32, i32
  }
  func.func @transform_5(%arg0: i32) -> (i32, i32) {
    %c0_i32 = arith.constant 0 : i32
    %c0_i32_0 = arith.constant 0 : i32
    %c0_i32_1 = arith.constant 0 : i32
    return %c0_i32, %c0_i32_0 : i32, i32
  }
  func.func @transform_6(%arg0: i32) -> (i32, i32) {
    %c0_i32 = arith.constant 0 : i32
    %c0_i32_0 = arith.constant 0 : i32
    %c0_i32_1 = arith.constant 0 : i32
    return %c0_i32, %c0_i32_0 : i32, i32
  }
  func.func @transform_7(%arg0: i32) -> (i32, i32, i32) {
    %c0_i32 = arith.constant 0 : i32
    %c0_i32_0 = arith.constant 0 : i32
    %c0_i32_1 = arith.constant 0 : i32
    return %arg0, %c0_i32, %c0_i32_0 : i32, i32, i32
  }
}

</mosaic_0001>

<llo_original>
// kernel: tpu_custom_call.1
$region0: #{tpu_custom_call.1}
  #allocation0 [shape = 'u32[]', space=smem, size = 0x4, offset = 0x4, fixed_abs, tag = 'smem constant byte address 0x4 - core index']
  #allocation1 [shape = 'u32[72,128]{1,0:T(1,128)}', space=vmem, size = 0x9000, scoped, tag = 'internal scratch']
  #allocation2 [shape = 'f32[1,1]{1,0:T(1,128)S(6)}', space=smem, size = 0x200, scoped, tag = 'scoped memory for tpu_custom_call.1']
  %s0 = inlined_call_operand.vmem [shape: f32[2,24], index: 0, kind: input, shape index: {}]
  %s1 = inlined_call_operand.hbm [shape: f32[2,8], index: 1, kind: input, shape index: {}]
  %s2 = inlined_call_operand.hbm [shape: f32[24,32], index: 2, kind: input, shape index: {}]
  %s3 = inlined_call_operand.hbm [shape: f32[8,32], index: 3, kind: input, shape index: {}]
  %s4 = inlined_call_operand.vmem [shape: f32[1,32], index: 4, kind: input, shape index: {}]
  %s5 = inlined_call_operand.vmem [shape: f32[1,32], index: 5, kind: input, shape index: {}]
  %s6 = inlined_call_operand.<no memory space> [shape: f32[1,1], index: 6, kind: input, shape index: {}]
  %s7 = inlined_call_operand.hbm [shape: f32[1,1,16], index: 7, kind: output, shape index: {}]
  %s8 = sld [smem:[#allocation0]]
  $region50: #{tpu_custom_call.1} parent=0
    _
  %s10 = ssub.s32 1, %s8
  %s11 = scalar_select 0, %s10, %s8
  %12 = sst [smem:[#allocation2]] %s6
  $region1: #{tpu_custom_call.1} parent=0
    #allocation3 [shape = 'u8[8192]{0}', space=vmem, size = 0x2000, scoped, tag = 'input window, operand 1, single buffered']
    #allocation4 [shape = 's32[1]{0}', space=sflag, size = 0x4, scoped, tag = 'scoped memory for tpu_custom_call.1']
    #allocation5 [shape = 's32[1]{0}', space=sflag, size = 0x4, scoped, tag = 'scoped memory for tpu_custom_call.1']
    #allocation6 [shape = 'u8[12288]{0}', space=vmem, size = 0x3000, scoped, tag = 'input window, operand 2, single buffered']
    #allocation7 [shape = 's32[1]{0}', space=sflag, size = 0x4, scoped, tag = 'scoped memory for tpu_custom_call.1']
    #allocation8 [shape = 'u8[4096]{0}', space=vmem, size = 0x1000, scoped, tag = 'input window, operand 3, single buffered']
    #allocation9 [shape = 'u8[512]{0}', space=vmem, size = 0x400, scoped, tag = 'output window, operand 0, single buffered']
    %13 = vsyncpa [#allocation4], 0
    %14 = vsyncpa [#allocation7], 0
    %15 = vsyncpa [#allocation5], 0
    // Predicated region
    $region2: #{tpu_custom_call.1} parent=1 // pred_check
      _
    $region3: #{tpu_custom_call.1} parent=1 // pred_check_branch
      %17 = sbr.rel (0) target = $region5
    $region4: #{tpu_custom_call.1} parent=1 // pred_region
      _
    $region5: #{tpu_custom_call.1} parent=1 // pred_fallthru
      _
    // Predicated region
    $region6: #{tpu_custom_call.1} parent=1 // pred_check
      _
    $region7: #{tpu_custom_call.1} parent=1 // pred_check_branch
      %19 = sbr.rel (0) target = $region9
    $region8: #{tpu_custom_call.1} parent=1 // pred_region
      %21 = vsyncadd [#allocation4], 224
      %s22 = sshll.u32 %s1, 4
      %s23 = int_to_ptr.hbm [resolvable:$true] %s22
      %s24 = sshll.u32 [#allocation3], 4
      %s25 = int_to_ptr.vmem [resolvable:$true] %s24
      %30 = dma.hbm_to_vmem [thread:$0]  %s23, 32, %s25, [#allocation4], 32, 32, 2
    $region9: #{tpu_custom_call.1} parent=1 // pred_fallthru
      _
    // Predicated region
    $region10: #{tpu_custom_call.1} parent=1 // pred_check
      _
    $region11: #{tpu_custom_call.1} parent=1 // pred_check_branch
      %32 = sbr.rel (0) target = $region13
    $region12: #{tpu_custom_call.1} parent=1 // pred_region
      %34 = vsyncadd [#allocation7], 0
      %s35 = sshll.u32 %s2, 4
      %s36 = int_to_ptr.hbm [resolvable:$true] %s35
      %s37 = sshll.u32 [#allocation6], 4
      %s38 = int_to_ptr.vmem [resolvable:$true] %s37
      %43 = dma.hbm_to_vmem [thread:$0]  %s36, 384, %s38, [#allocation7], 128, 128, 8
    $region13: #{tpu_custom_call.1} parent=1 // pred_fallthru
      _
    // Predicated region
    $region14: #{tpu_custom_call.1} parent=1 // pred_check
      _
    $region15: #{tpu_custom_call.1} parent=1 // pred_check_branch
      %45 = sbr.rel (0) target = $region17
    $region16: #{tpu_custom_call.1} parent=1 // pred_region
      %47 = vsyncadd [#allocation7], 0
      %s49 = sshll.u32 %s3, 4
      %s50 = int_to_ptr.hbm [resolvable:$true] %s49
      %s51 = sshll.u32 [#allocation8], 4
      %s52 = int_to_ptr.vmem [resolvable:$true] %s51
      %54 = dma.hbm_to_vmem [thread:$0]  %s50, 128, %s52, [#allocation7]
    $region17: #{tpu_custom_call.1} parent=1 // pred_fallthru
      _
    // Predicated region
    $region18: #{tpu_custom_call.1} parent=1 // pred_check
      _
    $region19: #{tpu_custom_call.1} parent=1 // pred_check_branch
      %56 = sbr.rel (0) target = $region21
    $region20: #{tpu_custom_call.1} parent=1 // pred_region
      _
    $region21: #{tpu_custom_call.1} parent=1 // pred_fallthru
      _
    // Predicated region
    $region22: #{tpu_custom_call.1} parent=1 // pred_check
      _
    $region23: #{tpu_custom_call.1} parent=1 // pred_check_branch
      %58 = sbr.rel (0) target = $region25
    $region24: #{tpu_custom_call.1} parent=1 // pred_region
      _
    $region25: #{tpu_custom_call.1} parent=1 // pred_fallthru
      _
    // Predicated region
    $region26: #{tpu_custom_call.1} parent=1 // pred_check
      _
    $region27: #{tpu_custom_call.1} parent=1 // pred_check_branch
      %60 = sbr.rel (0) target = $region29
    $region28: #{tpu_custom_call.1} parent=1 // pred_region
      _
    $region29: #{tpu_custom_call.1} parent=1 // pred_fallthru
      _
    // Predicated region
    $region30: #{tpu_custom_call.1} parent=1 // pred_check
      _
    $region31: #{tpu_custom_call.1} parent=1 // pred_check_branch
      %62 = sbr.rel (0) target = $region33
    $region32: #{tpu_custom_call.1} parent=1 // pred_region
      %64 = dma.done [#allocation4], 256
    $region33: #{tpu_custom_call.1} parent=1 // pred_fallthru
      _
    // Predicated region
    $region34: #{tpu_custom_call.1} parent=1 // pred_check
      _
    $region35: #{tpu_custom_call.1} parent=1 // pred_check_branch
      %66 = sbr.rel (0) target = $region37
    $region36: #{tpu_custom_call.1} parent=1 // pred_region
      %68 = dma.done [#allocation7], 384
    $region37: #{tpu_custom_call.1} parent=1 // pred_fallthru
      _
    // Predicated region
    $region38: #{tpu_custom_call.1} parent=1 // pred_check
      _
    $region39: #{tpu_custom_call.1} parent=1 // pred_check_branch
      %70 = sbr.rel (0) target = $region41
    $region40: #{tpu_custom_call.1} parent=1 // pred_region
      %72 = dma.done [#allocation7], 128
    $region41: #{tpu_custom_call.1} parent=1 // pred_fallthru
      _
    %v73 = vld [vmem:[%s0] sm:$0xff]
    %v74 = vld [vmem:[%s0 + $0x8] sm:$0xff]
    %v75 = vld [vmem:[#allocation6] sm:$0xff]
    %v76 = vld [vmem:[#allocation6 + $0x8] sm:$0xff]
    %v77 = vld [vmem:[#allocation6 + $0x10] sm:$0xff]
    %v78 = vld [vmem:[#allocation3] sm:$0xff]
    %v79 = vld [vmem:[#allocation3 + $0x8] sm:$0xff]
    %v80 = vld [vmem:[#allocation8] sm:$0xff]
    %vm81 = vcmask 64512
    %v83 = vsel %vm81, %v78, 0
    %v86 = vsel %vm81, %v79, 0
    %88 = vmatpush.msra.mxu0 0.0
    %89 = vmatpush.msra.mxu0 0.0
    %90 = vmatpush.msra.mxu0 0.0
    %91 = vmatpush.msra.mxu0 0.0
    %92 = vmatpush.msra.mxu0 0.0
    %93 = vmatpush.msra.mxu0 0.0
    %94 = vmatpush.msra.mxu0 0.0
    %95 = vmatpush.msra.mxu0 0.0
    %96 = vmatpush.msra.mxu0 0.0
    %97 = vmatpush.msra.mxu0 0.0
    %98 = vmatpush.msra.mxu0 0.0
    %99 = vmatpush.msra.mxu0 0.0
    %100 = vmatpush.msra.mxu0 0.0
    %101 = vmatpush.msra.mxu0 0.0
    %102 = vmatpush.msra.mxu0 0.0
    %103 = vmatpush.msra.mxu0 %v80
    %104 = vmatmul.f32.gmra.mxu0 %v83
    %v105 = vpop.f32.mrf.mxu0
    %v106 = vadd.f32 0.0, %v105
    %107 = vmatmul.f32.gmra.mxu0 %v86
    %v108 = vpop.f32.mrf.mxu0
    %v109 = vadd.f32 0.0, %v108
    %110 = vdwg.mxu0
    %vm111 = vcmask 195584
    %v113 = vsel %vm111, %v73, 0
    %v116 = vsel %vm111, %v74, 0
    %118 = vmatpush.msra.mxu0 0.0
    %119 = vmatpush.msra.mxu0 0.0
    %120 = vmatpush.msra.mxu0 0.0
    %121 = vmatpush.msra.mxu0 0.0
    %122 = vmatpush.msra.mxu0 0.0
    %123 = vmatpush.msra.mxu0 0.0
    %124 = vmatpush.msra.mxu0 0.0
    %125 = vmatpush.msra.mxu0 0.0
    %126 = vmatpush.msra.mxu0 0.0
    %127 = vmatpush.msra.mxu0 0.0
    %128 = vmatpush.msra.mxu0 0.0
    %129 = vmatpush.msra.mxu0 0.0
    %130 = vmatpush.msra.mxu0 0.0
    %131 = vmatpush.msra.mxu0 %v77
    %132 = vmatpush.msra.mxu0 %v76
    %133 = vmatpush.msra.mxu0 %v75
    %134 = vmatmul.f32.gmra.mxu0 %v113
    %v135 = vpop.f32.mrf.mxu0
    %v136 = vadd.f32 %v106, %v135
    %137 = vmatmul.f32.gmra.mxu0 %v116
    %v138 = vpop.f32.mrf.mxu0
    %v139 = vadd.f32 %v109, %v138
    %140 = vdwg.mxu0
    %v141 = vld [vmem:[%s4] sm:$0x1]
    %v143 = vperm.slane %v141, 0
    %v145 = vadd.f32 %v136, %v143
    %v146 = vadd.f32 %v139, %v143
    %v147 = vmax.f32 %v145, 0.0
    %v148 = vmax.f32 %v146, 0.0
    %v149 = vld [vmem:[%s5] sm:$0x1]
    %s150 = sld [smem:[#allocation2]]
    %v151 = vstv %s150
    %vm152 = vcmask 261120
    %v154 = vsel %vm152, %v149, 0
    %v157 = vsel %vm152, %v147, 0
    %v160 = vsel %vm152, %v148, 0
    %162 = vmatpush.xpose.msra.mxu0 0.0
    %163 = vmatpush.xpose.msra.mxu0 0.0
    %164 = vmatpush.xpose.msra.mxu0 0.0
    %165 = vmatpush.xpose.msra.mxu0 0.0
    %166 = vmatpush.xpose.msra.mxu0 0.0
    %167 = vmatpush.xpose.msra.mxu0 0.0
    %168 = vmatpush.xpose.msra.mxu0 0.0
    %169 = vmatpush.xpose.msra.mxu0 0.0
    %170 = vmatpush.xpose.msra.mxu0 0.0
    %171 = vmatpush.xpose.msra.mxu0 0.0
    %172 = vmatpush.xpose.msra.mxu0 0.0
    %173 = vmatpush.xpose.msra.mxu0 0.0
    %174 = vmatpush.xpose.msra.mxu0 0.0
    %175 = vmatpush.xpose.msra.mxu0 0.0
    %176 = vmatpush.xpose.msra.mxu0 %v160
    %177 = vmatpush.xpose.msra.mxu0 %v157
    %178 = vmatmul.f32.gmra.mxu0 %v154
    %v179 = vpop.f32.mrf.mxu0
    %v180 = vadd.f32 %v151, %v179
    %181 = vdwg.mxu0
    %v182 = vmax.f32 %v180, 0.0
    %vm183 = vcmask 122880
    %184 = vst.msk [vmem:[#allocation9] sm:$0x1] %vm183, %v182
    // Predicated region
    $region42: #{tpu_custom_call.1} parent=1 // pred_check
      _
    $region43: #{tpu_custom_call.1} parent=1 // pred_check_branch
      %186 = sbr.rel (0) target = $region45
    $region44: #{tpu_custom_call.1} parent=1 // pred_region
      %188 = vsyncadd [#allocation5], 0
      %s190 = sshll.u32 [#allocation9], 4
      %s191 = int_to_ptr.vmem [resolvable:$true] %s190
      %s192 = sshll.u32 %s7, 4
      %s193 = int_to_ptr.hbm [resolvable:$true] %s192
      %195 = dma.vmem_to_hbm [thread:$0]  %s191, 16, %s193, [#allocation5]
    $region45: #{tpu_custom_call.1} parent=1 // pred_fallthru
      _
    // Predicated region
    $region46: #{tpu_custom_call.1} parent=1 // pred_check
      _
    $region47: #{tpu_custom_call.1} parent=1 // pred_check_branch
      %197 = sbr.rel (0) target = $region49
    $region48: #{tpu_custom_call.1} parent=1 // pred_region
      %199 = dma.done [#allocation5], 16
    $region49: #{tpu_custom_call.1} parent=1 // pred_fallthru
      _
    %200 = vsyncpa [#allocation4], 1
    %201 = vsyncpa [#allocation7], 1
    %202 = vsyncpa [#allocation5], 1

</llo_original>
